<compile_context>
chip_gen: v5e
topology: v5e:2x2
jax: 0.10.0
libtpu: 0.0.40
codegen_flags: <defaults>
</compile_context>

<pallas_src>
import jax
import jax.numpy as jnp
from jax import lax
from jax.experimental import pallas as pl
from jax.experimental.pallas import tpu as pltpu


# ----------------------------------------------------------------------------
# Fused forward kernel, one batch tile per grid step:
#   x_flat [TB, C*H*W] --bf16 MXU (folded patchify+pool+embed+proj)--> features [TB, D] f32
#   features --L2 normalize (f32)--> --bf16 MXU vs pre-baked W^T--> logits [TB, C_pad] f32
# ----------------------------------------------------------------------------
def _easenet_fwd_kernel(x_ref, w_img_ref, w_fc_t_ref, feat_ref, logits_ref):
    # Raw NCHW image tile, flattened to [TB, C*H*W].  Cast to bf16 only as the MXU
    # operand (accepts bf16 inputs unchanged).  Patchify + mean-pool + patch-embed +
    # projection are all folded into w_img offline, so this is ONE matmul.
    x = x_ref[...].astype(jnp.bfloat16)
    feat = jnp.dot(x, w_img_ref[...], preferred_element_type=jnp.float32)   # [TB, D] f32
    feat_ref[...] = feat

    # CosineLinear (proxy_fc): L2-normalize features in f32; norm clamped at 1e-12
    # (rsqrt(max(ssq, 1e-24))), matching F.normalize.  The classifier weight is already
    # normalized, sigma-scaled, transposed and lane-padded -> plain matmul, no .T.
    ssq = jnp.sum(feat * feat, axis=-1, keepdims=True)
    feat_n = (feat * lax.rsqrt(jnp.maximum(ssq, 1e-24))).astype(jnp.bfloat16)
    logits_ref[...] = jnp.dot(
        feat_n, w_fc_t_ref[...], preferred_element_type=jnp.float32
    )                                                                        # [TB, C_pad] f32


def _pick_batch_tile(B, K, D, C_pad, vmem_budget_bytes=24 << 20):
    """Largest sublane-aligned batch tile such that:
       (a) double-buffered x/feat/logits rows + resident weights fit a conservative
           budget that holds on every generation (v7x: 64 MiB physical VMEM),
       (b) M stays MXU-friendly (capped at 256),
       (c) there are >= 2 grid steps when B allows, so v7x's two TensorCores both get work.
    """
    if B <= 8:
        return B                                        # block == full array dim is legal
    row_bytes = 2 * 4 * (K + D + C_pad)                 # double-buffered f32 rows
    weight_bytes = 2 * (K * D + D * C_pad)              # bf16 weights, VMEM-resident
    tb_budget = max(8, (vmem_budget_bytes - weight_bytes) // row_bytes)
    tb = min(256, int(tb_budget), (B + 1) // 2)
    return max(8, (tb // 8) * 8)


def easenet_forward_pallas(x_flat, w_img_bf16, w_fc_t_bf16):
    B, K = x_flat.shape
    K2, D = w_img_bf16.shape
    D2, C_pad = w_fc_t_bf16.shape
    assert K == K2 and D == D2 and C_pad % 128 == 0

    TB = _pick_batch_tile(B, K, D, C_pad)

    return pl.pallas_call(
        _easenet_fwd_kernel,
        out_shape=(
            jax.ShapeDtypeStruct((B, D), jnp.float32),       # features (un-normalized)
            jax.ShapeDtypeStruct((B, C_pad), jnp.float32),   # lane-padded logits
        ),
        grid=(pl.cdiv(B, TB),),
        in_specs=[
            pl.BlockSpec((TB, K), lambda i: (i, 0)),         # streamed batch tiles
            pl.BlockSpec((K, D), lambda i: (0, 0)),          # constant block -> no re-DMA
            pl.BlockSpec((D, C_pad), lambda i: (0, 0)),      # constant block -> no re-DMA
        ],
        out_specs=(
            pl.BlockSpec((TB, D), lambda i: (i, 0)),
            pl.BlockSpec((TB, C_pad), lambda i: (i, 0)),
        ),
        compiler_params=pltpu.CompilerParams(
            dimension_semantics=("parallel",),               # batch tiles are independent
            vmem_limit_bytes=32 * 1024 * 1024,               # explicit; working set ~4 MiB << v7x 64 MiB
        ),
    )(x_flat, w_img_bf16, w_fc_t_bf16)


# ----------------------------------------------------------------------------
# EaseNet (simplified, deterministic synthetic encoder weights)
# ----------------------------------------------------------------------------
class EaseNetPallas:
    # TODO(synk): the pretrained ViT backbone + EASE adapter experts, the test-path
    # cumulative fc / forward_reweight, and gradient flow to proxy_fc.weight / sigma
    # (forward-only; weights are baked into w_fc_t at update_fc time) are not reproduced.

    def __init__(self, *, embed_dim=128, image_channels=3, image_size=16,
                 patch_size=8, init_cls=10, increment=10, seed=0):
        assert image_size % patch_size == 0
        self.embed_dim = embed_dim
        self.image_channels = image_channels
        self.image_size = image_size
        self.patch_size = patch_size
        self.init_cls = init_cls
        self.inc = increment
        self._cur_task = -1

        patch_dim = image_channels * patch_size * patch_size
        nh = nw = image_size // patch_size
        num_patches = nh * nw
        self.patch_dim = patch_dim

        k = jax.random.split(jax.random.PRNGKey(seed), 3)
        w_patch = jax.random.normal(k[0], (patch_dim, embed_dim), jnp.float32) / (patch_dim ** 0.5)
        w_proj = jax.random.normal(k[1], (embed_dim, embed_dim), jnp.float32) / (embed_dim ** 0.5)
        self.w_patch_f32 = w_patch   # kept (f32) only for the pure-JAX reference check
        self.w_proj_f32 = w_proj

        # Offline fusion (exact linear algebra): patchify, patch-embed, mean-pool over
        # patches and the image projection are all linear, so
        #   mean_p(patchify(x) @ w_patch) @ w_proj == x_flat @ w_img
        # with per-pixel weight  w_img[(c,i,j), d] = w_enc[(c, i%p, j%p), d] / P,
        # where w_enc = w_patch @ w_proj.  One matmul in the kernel, no patchify
        # transpose, no in-kernel pooling, and 1/P folded into the weight.
        w_enc = jnp.dot(w_patch, w_proj)                                     # [patch_dim, D]
        w_enc_r = w_enc.reshape(image_channels, patch_size, patch_size, embed_dim)
        w_img = jnp.tile(w_enc_r[:, None, :, None, :, :], (1, nh, 1, nw, 1, 1))
        w_img = w_img.reshape(image_channels * image_size * image_size, embed_dim) / num_patches
        self.w_img = w_img.astype(jnp.bfloat16)                              # [C*H*W, D] bf16

        self._fc_key = k[2]
        self.sigma = jnp.float32(1.0)   # CosineLinear sigma (init 1.0)
        self.proxy_fc_weight = None     # raw [C, D] weight (reference form)
        self.w_fc_t = None              # baked: normalized * sigma, transposed, lane-padded, bf16
        self.num_classes = 0

    # --- class-incremental head update (CosineLinear proxy_fc) ---------------
    def update_fc(self, nb_classes):
        # Train-path head only: EaseNet.proxy_fc has init_cls outputs for task 0 and
        # `increment` outputs afterwards (nb_classes only sizes the test-path cumulative
        # fc, which is not implemented here).
        self._cur_task += 1
        out_dim = self.init_cls if self._cur_task == 0 else self.inc
        self._fc_key, sub = jax.random.split(self._fc_key)
        w = jax.random.normal(sub, (out_dim, self.embed_dim), jnp.float32) / (self.embed_dim ** 0.5)
        self.proxy_fc_weight = w
        self.num_classes = out_dim

        # Hoisted out of forward(): CosineLinear weight normalization (norm clamped at
        # 1e-12, as in F.normalize), sigma scaling, transpose to [D, C] and lane-padding
        # of C to a multiple of 128, done once per update_fc.
        # TODO(synk): if proxy_fc.weight / sigma were trained between update_fc calls,
        # w_fc_t would need re-baking (no autodiff through the pallas_call).
        w_n = w * lax.rsqrt(jnp.maximum(jnp.sum(w * w, axis=-1, keepdims=True), 1e-24))
        w_n = self.sigma * w_n
        c_pad = max(128, ((out_dim + 127) // 128) * 128)
        w_t = jnp.zeros((self.embed_dim, c_pad), jnp.float32)
        w_t = w_t.at[:, :out_dim].set(w_n.T)            # padded cols zero -> logits 0, sliced off
        self.w_fc_t = w_t.astype(jnp.bfloat16)

    # --- forward: matches EaseNet.forward (train path) -----------------------
    def forward(self, x, test=False):
        if test:
            # TODO(synk): test path (multi-adapter concatenated features, cumulative fc,
            # forward_reweight) needs the pretrained adapter experts; not implemented.
            raise NotImplementedError("test path not implemented in simplified Pallas EaseNet")
        B = x.shape[0]
        # Contiguous NCHW flatten only (metadata reshape) — the old wrapper-side patchify
        # transpose (a full HBM read+rewrite of the input before the kernel) is gone.
        x_flat = x.reshape(B, -1)
        feat, logits_pad = easenet_forward_pallas(x_flat, self.w_img, self.w_fc_t)
        logits = logits_pad[:, :self.num_classes]
        return {"logits": logits, "features": feat}


# ----------------------------------------------------------------------------
# Pure-JAX reference (un-fused math, f32) for correctness checking
# ----------------------------------------------------------------------------
def _reference_forward(model, x):
    B, C, H, W = x.shape
    p = model.patch_size
    nh, nw = H // p, W // p
    patches = x.reshape(B, C, nh, p, nw, p).transpose(0, 2, 4, 1, 3, 5).reshape(B, nh * nw, C * p * p)
    pooled = patches.mean(axis=1)                                    # [B, patch_dim]
    feat = pooled @ model.w_patch_f32 @ model.w_proj_f32             # [B, D]
    feat_n = feat * lax.rsqrt(jnp.maximum(jnp.sum(feat * feat, -1, keepdims=True), 1e-24))
    w = model.proxy_fc_weight
    w_n = w * lax.rsqrt(jnp.maximum(jnp.sum(w * w, -1, keepdims=True), 1e-24))
    logits = model.sigma * (feat_n @ w_n.T)
    return feat, logits


# ----------------------------------------------------------------------------
if __name__ == "__main__":
    model = EaseNetPallas(
        embed_dim=128, image_channels=3, image_size=16, patch_size=8,
        init_cls=10, increment=10, seed=0,
    )
    model.update_fc(nb_classes=10)   # task 0: proxy_fc over init_cls classes

    root = jax.random.PRNGKey(0)
    k_small, k_big = jax.random.split(root)

    # --- small batch (grid = 1 step) ------------------------------------------------
    x_small = jax.random.normal(k_small, (2, 3, 16, 16), jnp.float32)
    out = model.forward(x_small, test=False)
    logits = jax.block_until_ready(out["logits"])
    feats = jax.block_until_ready(out["features"])
    assert logits.shape == (2, 10)
    assert feats.shape == (2, 128)
    assert bool(jnp.all(jnp.isfinite(logits)))
    assert bool(jnp.all(jnp.isfinite(feats)))
    # CosineLinear with sigma=1: logits are cosine similarities (bf16 rounding slack)
    assert bool(jnp.all(jnp.abs(logits) <= 1.0 + 2e-2))
    f_ref, l_ref = _reference_forward(model, x_small)
    assert bool(jnp.allclose(feats, f_ref, rtol=5e-2, atol=5e-2))
    assert bool(jnp.allclose(logits, l_ref, rtol=5e-2, atol=5e-2))

    # --- larger batch exercises the batch-tiled pipeline (grid > 1, resident weights) --
    x_big = jax.random.normal(k_big, (24, 3, 16, 16), jnp.float32)
    out = model.forward(x_big, test=False)
    logits = jax.block_until_ready(out["logits"])
    feats = jax.block_until_ready(out["features"])
    assert logits.shape == (24, 10)
    assert feats.shape == (24, 128)
    assert bool(jnp.all(jnp.isfinite(logits)))
    assert bool(jnp.all(jnp.isfinite(feats)))
    f_ref, l_ref = _reference_forward(model, x_big)
    assert bool(jnp.allclose(feats, f_ref, rtol=5e-2, atol=5e-2))
    assert bool(jnp.allclose(logits, l_ref, rtol=5e-2, atol=5e-2))

    print("KERNEL_OK")
</pallas_src>

<mosaic_0001>
module attributes {stable_mosaic.version = 11 : i64} {
  func.func @_easenet_fwd_kernel(%arg0: i32, %arg1: memref<2x768xf32, #tpu.memory_space<vmem>>, %arg2: memref<768x128xbf16, #tpu.memory_space<vmem>>, %arg3: memref<128x128xbf16, #tpu.memory_space<vmem>>, %arg4: memref<2x128xf32, #tpu.memory_space<vmem>>, %arg5: memref<2x128xf32, #tpu.memory_space<vmem>>) attributes {dimension_semantics = [#tpu.dimension_semantics<parallel>], iteration_bounds = array<i64: 1>, scalar_prefetch = 0 : i64, scratch_operands = 0 : i64, tpu.core_type = #tpu.core_type<tc>, window_params = [{transform_indices = @transform_0, window_bounds = array<i64: 2, 768>}, {pipeline_mode = #tpu.pipeline_mode<synchronous>, transform_indices = @transform_1, window_bounds = array<i64: 768, 128>}, {pipeline_mode = #tpu.pipeline_mode<synchronous>, transform_indices = @transform_2, window_bounds = array<i64: 128, 128>}, {transform_indices = @transform_3, window_bounds = array<i64: 2, 128>}, {transform_indices = @transform_4, window_bounds = array<i64: 2, 128>}]} {
    %c0 = arith.constant 0 : index
    %c0_0 = arith.constant 0 : index
    %0 = vector.load %arg1[%c0, %c0_0] : memref<2x768xf32, #tpu.memory_space<vmem>>, vector<2x768xf32>
    %1 = arith.truncf %0 : vector<2x768xf32> to vector<2x768xbf16>
    %c0_1 = arith.constant 0 : index
    %c0_2 = arith.constant 0 : index
    %2 = vector.load %arg2[%c0_1, %c0_2] : memref<768x128xbf16, #tpu.memory_space<vmem>>, vector<768x128xbf16>
    %cst = arith.constant dense<0.000000e+00> : vector<2x128xf32>
    %3 = tpu.matmul %1, %2, %cst {dimension_numbers = #tpu.dot_dimension_numbers<[1], [0], [0], [1], [0, 0, 1, 1], [], []>} : vector<2x768xbf16>, vector<768x128xbf16>, vector<2x128xf32> -> vector<2x128xf32>
    %c0_3 = arith.constant 0 : index
    %c0_4 = arith.constant 0 : index
    %4 = vector.load %arg4[%c0_3, %c0_4] : memref<2x128xf32, #tpu.memory_space<vmem>>, vector<2x128xf32>
    tpu.vector_store %arg4[%c0_3, %c0_4], %3 {strides = array<i32>} : memref<2x128xf32, #tpu.memory_space<vmem>>, vector<2x128xf32>,
    %5 = arith.mulf %3, %3 : vector<2x128xf32>
    %cst_5 = arith.constant dense<0.000000e+00> : vector<2xf32>
    %6 = vector.multi_reduction <add>, %5, %cst_5 [1] : vector<2x128xf32> to vector<2xf32>
    %7 = vector.shape_cast %6 : vector<2xf32> to vector<2x1xf32>
    %cst_6 = arith.constant 1.000000e-24 : f32
    %8 = vector.broadcast %cst_6 : f32 to vector<2x1xf32>
    %9 = arith.maximumf %7, %8 : vector<2x1xf32>
    %10 = math.rsqrt %9 : vector<2x1xf32>
    %11 = vector.broadcast %10 : vector<2x1xf32> to vector<2x128xf32>
    %12 = arith.mulf %3, %11 : vector<2x128xf32>
    %13 = arith.truncf %12 : vector<2x128xf32> to vector<2x128xbf16>
    %c0_7 = arith.constant 0 : index
    %c0_8 = arith.constant 0 : index
    %14 = vector.load %arg3[%c0_7, %c0_8] : memref<128x128xbf16, #tpu.memory_space<vmem>>, vector<128x128xbf16>
    %cst_9 = arith.constant dense<0.000000e+00> : vector<2x128xf32>
    %15 = tpu.matmul %13, %14, %cst_9 {dimension_numbers = #tpu.dot_dimension_numbers<[1], [0], [0], [1], [0, 0, 1, 1], [], []>} : vector<2x128xbf16>, vector<128x128xbf16>, vector<2x128xf32> -> vector<2x128xf32>
    %c0_10 = arith.constant 0 : index
    %c0_11 = arith.constant 0 : index
    %16 = vector.load %arg5[%c0_10, %c0_11] : memref<2x128xf32, #tpu.memory_space<vmem>>, vector<2x128xf32>
    tpu.vector_store %arg5[%c0_10, %c0_11], %15 {strides = array<i32>} : memref<2x128xf32, #tpu.memory_space<vmem>>, vector<2x128xf32>,
    return
  }
  func.func @transform_0(%arg0: i32) -> (i32, i32) {
    %c0_i32 = arith.constant 0 : i32
    %c0_i32_0 = arith.constant 0 : i32
    return %arg0, %c0_i32 : i32, i32
  }
  func.func @transform_1(%arg0: i32) -> (i32, i32) {
    %c0_i32 = arith.constant 0 : i32
    %c0_i32_0 = arith.constant 0 : i32
    %c0_i32_1 = arith.constant 0 : i32
    return %c0_i32, %c0_i32_0 : i32, i32
  }
  func.func @transform_2(%arg0: i32) -> (i32, i32) {
    %c0_i32 = arith.constant 0 : i32
    %c0_i32_0 = arith.constant 0 : i32
    %c0_i32_1 = arith.constant 0 : i32
    return %c0_i32, %c0_i32_0 : i32, i32
  }
  func.func @transform_3(%arg0: i32) -> (i32, i32) {
    %c0_i32 = arith.constant 0 : i32
    %c0_i32_0 = arith.constant 0 : i32
    return %arg0, %c0_i32 : i32, i32
  }
  func.func @transform_4(%arg0: i32) -> (i32, i32) {
    %c0_i32 = arith.constant 0 : i32
    %c0_i32_0 = arith.constant 0 : i32
    return %arg0, %c0_i32 : i32, i32
  }
}

</mosaic_0001>

<llo_original>
// kernel: tpu_custom_call.1
$region0: #{tpu_custom_call.1}
  #allocation0 [shape = 'u32[]', space=smem, size = 0x4, offset = 0x4, fixed_abs, tag = 'smem constant byte address 0x4 - core index']
  #allocation1 [shape = 'u32[72,128]{1,0:T(1,128)}', space=vmem, size = 0x9000, scoped, tag = 'internal scratch']
  %s0 = inlined_call_operand.hbm [shape: f32[2,768], index: 0, kind: input, shape index: {}]
  %s1 = inlined_call_operand.hbm [shape: bf16[768,128], index: 1, kind: input, shape index: {}]
  %s2 = inlined_call_operand.hbm [shape: bf16[128,128], index: 2, kind: input, shape index: {}]
  %s3 = inlined_call_operand.hbm [shape: f32[2,128], index: 3, kind: output, shape index: {0}]
  %s4 = inlined_call_operand.hbm [shape: f32[2,128], index: 4, kind: output, shape index: {1}]
  %5 = xla_tuple %s3, %s4
  %s6 = sld [smem:[#allocation0]]
  $region42: #{tpu_custom_call.1} parent=0
    _
  %s8 = ssub.s32 1, %s6
  %s9 = scalar_select 0, %s8, %s6
  $region1: #{tpu_custom_call.1} parent=0
    #allocation2 [shape = 'u8[6144]{0}', space=vmem, size = 0x1800, scoped, tag = 'input window, operand 0, single buffered']
    #allocation3 [shape = 's32[1]{0}', space=sflag, size = 0x4, scoped, tag = 'scoped memory for tpu_custom_call.1']
    #allocation4 [shape = 's32[1]{0}', space=sflag, size = 0x4, scoped, tag = 'scoped memory for tpu_custom_call.1']
    #allocation5 [shape = 'u8[196608]{0}', space=vmem, size = 0x30000, scoped, tag = 'input window, operand 1, single buffered']
    #allocation6 [shape = 's32[1]{0}', space=sflag, size = 0x4, scoped, tag = 'scoped memory for tpu_custom_call.1']
    #allocation7 [shape = 'u8[32768]{0}', space=vmem, size = 0x8000, scoped, tag = 'input window, operand 2, single buffered']
    #allocation8 [shape = 'u8[1024]{0}', space=vmem, size = 0x400, scoped, tag = 'output window, operand 0, single buffered']
    #allocation9 [shape = 'u8[1024]{0}', space=vmem, size = 0x400, scoped, tag = 'output window, operand 1, single buffered']
    #allocation10 [shape = 's32[1]{0}', space=sflag, size = 0x4, scoped, tag = 'scoped memory for tpu_custom_call.1']
    %10 = vsyncpa [#allocation3], 0
    %11 = vsyncpa [#allocation6], 0
    %12 = vsyncpa [#allocation4], 0
    %13 = vsyncpa [#allocation10], 0
    // Predicated region
    $region2: #{tpu_custom_call.1} parent=1 // pred_check
      _
    $region3: #{tpu_custom_call.1} parent=1 // pred_check_branch
      %15 = sbr.rel (0) target = $region5
    $region4: #{tpu_custom_call.1} parent=1 // pred_region
      %17 = vsyncadd [#allocation3], 0
      %s19 = sshll.u32 %s0, 4
      %s20 = int_to_ptr.hbm [resolvable:$true] %s19
      %s21 = sshll.u32 [#allocation2], 4
      %s22 = int_to_ptr.vmem [resolvable:$true] %s21
      %24 = dma.hbm_to_vmem [thread:$0]  %s20, 192, %s22, [#allocation3]
    $region5: #{tpu_custom_call.1} parent=1 // pred_fallthru
      _
    // Predicated region
    $region6: #{tpu_custom_call.1} parent=1 // pred_check
      _
    $region7: #{tpu_custom_call.1} parent=1 // pred_check_branch
      %26 = sbr.rel (0) target = $region9
    $region8: #{tpu_custom_call.1} parent=1 // pred_region
      %28 = vsyncadd [#allocation6], 0
      %s29 = sshll.u32 %s1, 4
      %s30 = int_to_ptr.hbm [resolvable:$true] %s29
      %s31 = sshll.u32 [#allocation5], 4
      %s32 = int_to_ptr.vmem [resolvable:$true] %s31
      %37 = dma.hbm_to_vmem [thread:$0]  %s30, 6144, %s32, [#allocation6], 64, 64, 4
    $region9: #{tpu_custom_call.1} parent=1 // pred_fallthru
      _
    // Predicated region
    $region10: #{tpu_custom_call.1} parent=1 // pred_check
      _
    $region11: #{tpu_custom_call.1} parent=1 // pred_check_branch
      %39 = sbr.rel (0) target = $region13
    $region12: #{tpu_custom_call.1} parent=1 // pred_region
      %41 = vsyncadd [#allocation6], 0
      %s42 = sshll.u32 %s2, 4
      %s43 = int_to_ptr.hbm [resolvable:$true] %s42
      %s44 = sshll.u32 [#allocation7], 4
      %s45 = int_to_ptr.vmem [resolvable:$true] %s44
      %50 = dma.hbm_to_vmem [thread:$0]  %s43, 1024, %s45, [#allocation6], 64, 64, 4
    $region13: #{tpu_custom_call.1} parent=1 // pred_fallthru
      _
    // Predicated region
    $region14: #{tpu_custom_call.1} parent=1 // pred_check
      _
    $region15: #{tpu_custom_call.1} parent=1 // pred_check_branch
      %52 = sbr.rel (0) target = $region17
    $region16: #{tpu_custom_call.1} parent=1 // pred_region
      %54 = dma.done [#allocation3], 192
    $region17: #{tpu_custom_call.1} parent=1 // pred_fallthru
      _
    // Predicated region
    $region18: #{tpu_custom_call.1} parent=1 // pred_check
      _
    $region19: #{tpu_custom_call.1} parent=1 // pred_check_branch
      %56 = sbr.rel (0) target = $region21
    $region20: #{tpu_custom_call.1} parent=1 // pred_region
      %58 = dma.done [#allocation6], 6144
    $region21: #{tpu_custom_call.1} parent=1 // pred_fallthru
      _
    // Predicated region
    $region22: #{tpu_custom_call.1} parent=1 // pred_check
      _
    $region23: #{tpu_custom_call.1} parent=1 // pred_check_branch
      %60 = sbr.rel (0) target = $region25
    $region24: #{tpu_custom_call.1} parent=1 // pred_region
      %62 = dma.done [#allocation6], 1024
    $region25: #{tpu_custom_call.1} parent=1 // pred_fallthru
      _
    %v63 = vld [vmem:[#allocation2] sm:$0xff]
    %v64 = vld [vmem:[#allocation2 + $0x8] sm:$0xf]
    %67 = vst [vmem:[#allocation1] ss:$4 sm:$0xff] %v63
    %s68 = scalar_lea.vmem [#allocation1], 32
    %69 = vst [vmem:[%s68] ss:$4 sm:$0xff] %v64
    %v70 = vld.sshfl [vmem:[#allocation1] sm:$0xff pattern:$0x73625140]
    %v71 = vld.sshfl [vmem:[#allocation1 + $0x8] sm:$0xff pattern:$0x73625140]
    %v72 = vld.sshfl [vmem:[#allocation1 + $0x10] sm:$0xff pattern:$0x73625140]
    %v73 = vld.sshfl [vmem:[#allocation1 + $0x18] sm:$0xff pattern:$0x73625140]
    %v74 = vld.sshfl [vmem:[#allocation1 + $0x20] sm:$0xff pattern:$0x73625140]
    %v75 = vld.sshfl [vmem:[#allocation1 + $0x28] sm:$0xff pattern:$0x73625140]
    %v82 = vpack.c.bf16 %v70, %v70
    %v83 = vpack.c.bf16 %v71, %v71
    %v84 = vpack.c.bf16 %v72, %v72
    %v85 = vpack.c.bf16 %v73, %v73
    %v86 = vpack.c.bf16 %v74, %v74
    %v87 = vpack.c.bf16 %v75, %v75
    %v88 = vld [vmem:[#allocation5] sm:$0xf]
    %v89 = vld [vmem:[#allocation5 + $0x4] sm:$0xf]
    %v90 = vld [vmem:[#allocation5 + $0x8] sm:$0xf]
    %v91 = vld [vmem:[#allocation5 + $0xc] sm:$0xf]
    %v92 = vld [vmem:[#allocation5 + $0x10] sm:$0xf]
    %v93 = vld [vmem:[#allocation5 + $0x14] sm:$0xf]
    %v94 = vld [vmem:[#allocation5 + $0x18] sm:$0xf]
    %v95 = vld [vmem:[#allocation5 + $0x1c] sm:$0xf]
    %v96 = vld [vmem:[#allocation5 + $0x20] sm:$0xf]
    %v97 = vld [vmem:[#allocation5 + $0x24] sm:$0xf]
    %v98 = vld [vmem:[#allocation5 + $0x28] sm:$0xf]
    %v99 = vld [vmem:[#allocation5 + $0x2c] sm:$0xf]
    %v100 = vld [vmem:[#allocation5 + $0x30] sm:$0xf]
    %v101 = vld [vmem:[#allocation5 + $0x34] sm:$0xf]
    %v102 = vld [vmem:[#allocation5 + $0x38] sm:$0xf]
    %v103 = vld [vmem:[#allocation5 + $0x3c] sm:$0xf]
    %v104 = vld [vmem:[#allocation5 + $0x40] sm:$0xf]
    %v105 = vld [vmem:[#allocation5 + $0x44] sm:$0xf]
    %v106 = vld [vmem:[#allocation5 + $0x48] sm:$0xf]
    %v107 = vld [vmem:[#allocation5 + $0x4c] sm:$0xf]
    %v108 = vld [vmem:[#allocation5 + $0x50] sm:$0xf]
    %v109 = vld [vmem:[#allocation5 + $0x54] sm:$0xf]
    %v110 = vld [vmem:[#allocation5 + $0x58] sm:$0xf]
    %v111 = vld [vmem:[#allocation5 + $0x5c] sm:$0xf]
    %v112 = vld [vmem:[#allocation5 + $0x60] sm:$0xf]
    %v113 = vld [vmem:[#allocation5 + $0x64] sm:$0xf]
    %v114 = vld [vmem:[#allocation5 + $0x68] sm:$0xf]
    %v115 = vld [vmem:[#allocation5 + $0x6c] sm:$0xf]
    %v116 = vld [vmem:[#allocation5 + $0x70] sm:$0xf]
    %v117 = vld [vmem:[#allocation5 + $0x74] sm:$0xf]
    %v118 = vld [vmem:[#allocation5 + $0x78] sm:$0xf]
    %v119 = vld [vmem:[#allocation5 + $0x7c] sm:$0xf]
    %v120 = vld [vmem:[#allocation5 + $0x80] sm:$0xf]
    %v121 = vld [vmem:[#allocation5 + $0x84] sm:$0xf]
    %v122 = vld [vmem:[#allocation5 + $0x88] sm:$0xf]
    %v123 = vld [vmem:[#allocation5 + $0x8c] sm:$0xf]
    %v124 = vld [vmem:[#allocation5 + $0x90] sm:$0xf]
    %v125 = vld [vmem:[#allocation5 + $0x94] sm:$0xf]
    %v126 = vld [vmem:[#allocation5 + $0x98] sm:$0xf]
    %v127 = vld [vmem:[#allocation5 + $0x9c] sm:$0xf]
    %v128 = vld [vmem:[#allocation5 + $0xa0] sm:$0xf]
    %v129 = vld [vmem:[#allocation5 + $0xa4] sm:$0xf]
    %v130 = vld [vmem:[#allocation5 + $0xa8] sm:$0xf]
    %v131 = vld [vmem:[#allocation5 + $0xac] sm:$0xf]
    %v132 = vld [vmem:[#allocation5 + $0xb0] sm:$0xf]
    %v133 = vld [vmem:[#allocation5 + $0xb4] sm:$0xf]
    %v134 = vld [vmem:[#allocation5 + $0xb8] sm:$0xf]
    %v135 = vld [vmem:[#allocation5 + $0xbc] sm:$0xf]
    %v136 = vld [vmem:[#allocation5 + $0xc0] sm:$0xf]
    %v137 = vld [vmem:[#allocation5 + $0xc4] sm:$0xf]
    %v138 = vld [vmem:[#allocation5 + $0xc8] sm:$0xf]
    %v139 = vld [vmem:[#allocation5 + $0xcc] sm:$0xf]
    %v140 = vld [vmem:[#allocation5 + $0xd0] sm:$0xf]
    %v141 = vld [vmem:[#allocation5 + $0xd4] sm:$0xf]
    %v142 = vld [vmem:[#allocation5 + $0xd8] sm:$0xf]
    %v143 = vld [vmem:[#allocation5 + $0xdc] sm:$0xf]
    %v144 = vld [vmem:[#allocation5 + $0xe0] sm:$0xf]
    %v145 = vld [vmem:[#allocation5 + $0xe4] sm:$0xf]
    %v146 = vld [vmem:[#allocation5 + $0xe8] sm:$0xf]
    %v147 = vld [vmem:[#allocation5 + $0xec] sm:$0xf]
    %v148 = vld [vmem:[#allocation5 + $0xf0] sm:$0xf]
    %v149 = vld [vmem:[#allocation5 + $0xf4] sm:$0xf]
    %v150 = vld [vmem:[#allocation5 + $0xf8] sm:$0xf]
    %v151 = vld [vmem:[#allocation5 + $0xfc] sm:$0xf]
    %v152 = vld [vmem:[#allocation5 + $0x100] sm:$0xf]
    %v153 = vld [vmem:[#allocation5 + $0x104] sm:$0xf]
    %v154 = vld [vmem:[#allocation5 + $0x108] sm:$0xf]
    %v155 = vld [vmem:[#allocation5 + $0x10c] sm:$0xf]
    %v156 = vld [vmem:[#allocation5 + $0x110] sm:$0xf]
    %v157 = vld [vmem:[#allocation5 + $0x114] sm:$0xf]
    %v158 = vld [vmem:[#allocation5 + $0x118] sm:$0xf]
    %v159 = vld [vmem:[#allocation5 + $0x11c] sm:$0xf]
    %v160 = vld [vmem:[#allocation5 + $0x120] sm:$0xf]
    %v161 = vld [vmem:[#allocation5 + $0x124] sm:$0xf]
    %v162 = vld [vmem:[#allocation5 + $0x128] sm:$0xf]
    %v163 = vld [vmem:[#allocation5 + $0x12c] sm:$0xf]
    %v164 = vld [vmem:[#allocation5 + $0x130] sm:$0xf]
    %v165 = vld [vmem:[#allocation5 + $0x134] sm:$0xf]
    %v166 = vld [vmem:[#allocation5 + $0x138] sm:$0xf]
    %v167 = vld [vmem:[#allocation5 + $0x13c] sm:$0xf]
    %v168 = vld [vmem:[#allocation5 + $0x140] sm:$0xf]
    %v169 = vld [vmem:[#allocation5 + $0x144] sm:$0xf]
    %v170 = vld [vmem:[#allocation5 + $0x148] sm:$0xf]
    %v171 = vld [vmem:[#allocation5 + $0x14c] sm:$0xf]
    %v172 = vld [vmem:[#allocation5 + $0x150] sm:$0xf]
    %v173 = vld [vmem:[#allocation5 + $0x154] sm:$0xf]
    %v174 = vld [vmem:[#allocation5 + $0x158] sm:$0xf]
    %v175 = vld [vmem:[#allocation5 + $0x15c] sm:$0xf]
    %v176 = vld [vmem:[#allocation5 + $0x160] sm:$0xf]
    %v177 = vld [vmem:[#allocation5 + $0x164] sm:$0xf]
    %v178 = vld [vmem:[#allocation5 + $0x168] sm:$0xf]
    %v179 = vld [vmem:[#allocation5 + $0x16c] sm:$0xf]
    %v180 = vld [vmem:[#allocation5 + $0x170] sm:$0xf]
    %v181 = vld [vmem:[#allocation5 + $0x174] sm:$0xf]
    %v182 = vld [vmem:[#allocation5 + $0x178] sm:$0xf]
    %v183 = vld [vmem:[#allocation5 + $0x17c] sm:$0xf]
    %v280 = vunpack.c.l.b16 %v88
    %v281 = vunpack.c.l.b16 %v89
    %v282 = vunpack.c.l.b16 %v90
    %v283 = vunpack.c.l.b16 %v91
    %v284 = vunpack.c.l.b16 %v92
    %v285 = vunpack.c.l.b16 %v93
    %v286 = vunpack.c.l.b16 %v94
    %v287 = vunpack.c.l.b16 %v95
    %v288 = vunpack.c.l.b16 %v96
    %v289 = vunpack.c.l.b16 %v97
    %v290 = vunpack.c.l.b16 %v98
    %v291 = vunpack.c.l.b16 %v99
    %v292 = vunpack.c.l.b16 %v100
    %v293 = vunpack.c.l.b16 %v101
    %v294 = vunpack.c.l.b16 %v102
    %v295 = vunpack.c.l.b16 %v103
    %v296 = vunpack.c.l.b16 %v104
    %v297 = vunpack.c.l.b16 %v105
    %v298 = vunpack.c.l.b16 %v106
    %v299 = vunpack.c.l.b16 %v107
    %v300 = vunpack.c.l.b16 %v108
    %v301 = vunpack.c.l.b16 %v109
    %v302 = vunpack.c.l.b16 %v110
    %v303 = vunpack.c.l.b16 %v111
    %v304 = vunpack.c.l.b16 %v112
    %v305 = vunpack.c.l.b16 %v113
    %v306 = vunpack.c.l.b16 %v114
    %v307 = vunpack.c.l.b16 %v115
    %v308 = vunpack.c.l.b16 %v116
    %v309 = vunpack.c.l.b16 %v117
    %v310 = vunpack.c.l.b16 %v118
    %v311 = vunpack.c.l.b16 %v119
    %v312 = vunpack.c.l.b16 %v120
    %v313 = vunpack.c.l.b16 %v121
    %v314 = vunpack.c.l.b16 %v122
    %v315 = vunpack.c.l.b16 %v123
    %v316 = vunpack.c.l.b16 %v124
    %v317 = vunpack.c.l.b16 %v125
    %v318 = vunpack.c.l.b16 %v126
    %v319 = vunpack.c.l.b16 %v127
    %v320 = vunpack.c.l.b16 %v128
    %v321 = vunpack.c.l.b16 %v129
    %v322 = vunpack.c.l.b16 %v130
    %v323 = vunpack.c.l.b16 %v131
    %v324 = vunpack.c.l.b16 %v132
    %v325 = vunpack.c.l.b16 %v133
    %v326 = vunpack.c.l.b16 %v134
    %v327 = vunpack.c.l.b16 %v135
    %v328 = vunpack.c.l.b16 %v136
    %v329 = vunpack.c.l.b16 %v137
    %v330 = vunpack.c.l.b16 %v138
    %v331 = vunpack.c.l.b16 %v139
    %v332 = vunpack.c.l.b16 %v140
    %v333 = vunpack.c.l.b16 %v141
    %v334 = vunpack.c.l.b16 %v142
    %v335 = vunpack.c.l.b16 %v143
    %v336 = vunpack.c.l.b16 %v144
    %v337 = vunpack.c.l.b16 %v145
    %v338 = vunpack.c.l.b16 %v146
    %v339 = vunpack.c.l.b16 %v147
    %v340 = vunpack.c.l.b16 %v148
    %v341 = vunpack.c.l.b16 %v149
    %v342 = vunpack.c.l.b16 %v150
    %v343 = vunpack.c.l.b16 %v151
    %v344 = vunpack.c.l.b16 %v152
    %v345 = vunpack.c.l.b16 %v153
    %v346 = vunpack.c.l.b16 %v154
    %v347 = vunpack.c.l.b16 %v155
    %v348 = vunpack.c.l.b16 %v156
    %v349 = vunpack.c.l.b16 %v157
    %v350 = vunpack.c.l.b16 %v158
    %v351 = vunpack.c.l.b16 %v159
    %v352 = vunpack.c.l.b16 %v160
    %v353 = vunpack.c.l.b16 %v161
    %v354 = vunpack.c.l.b16 %v162
    %v355 = vunpack.c.l.b16 %v163
    %v356 = vunpack.c.l.b16 %v164
    %v357 = vunpack.c.l.b16 %v165
    %v358 = vunpack.c.l.b16 %v166
    %v359 = vunpack.c.l.b16 %v167
    %v360 = vunpack.c.l.b16 %v168
    %v361 = vunpack.c.l.b16 %v169
    %v362 = vunpack.c.l.b16 %v170
    %v363 = vunpack.c.l.b16 %v171
    %v364 = vunpack.c.l.b16 %v172
    %v365 = vunpack.c.l.b16 %v173
    %v366 = vunpack.c.l.b16 %v174
    %v367 = vunpack.c.l.b16 %v175
    %v368 = vunpack.c.l.b16 %v176
    %v369 = vunpack.c.l.b16 %v177
    %v370 = vunpack.c.l.b16 %v178
    %v371 = vunpack.c.l.b16 %v179
    %v372 = vunpack.c.l.b16 %v180
    %v373 = vunpack.c.l.b16 %v181
    %v374 = vunpack.c.l.b16 %v182
    %v375 = vunpack.c.l.b16 %v183
    %v376 = vpack.c.b16 %v281, %v280
    %v377 = vpack.c.b16 %v283, %v282
    %v378 = vpack.c.b16 %v285, %v284
    %v379 = vpack.c.b16 %v287, %v286
    %v380 = vpack.c.b16 %v289, %v288
    %v381 = vpack.c.b16 %v291, %v290
    %v382 = vpack.c.b16 %v293, %v292
    %v383 = vpack.c.b16 %v295, %v294
    %v384 = vpack.c.b16 %v297, %v296
    %v385 = vpack.c.b16 %v299, %v298
    %v386 = vpack.c.b16 %v301, %v300
    %v387 = vpack.c.b16 %v303, %v302
    %v388 = vpack.c.b16 %v305, %v304
    %v389 = vpack.c.b16 %v307, %v306
    %v390 = vpack.c.b16 %v309, %v308
    %v391 = vpack.c.b16 %v311, %v310
    %v392 = vpack.c.b16 %v313, %v312
    %v393 = vpack.c.b16 %v315, %v314
    %v394 = vpack.c.b16 %v317, %v316
    %v395 = vpack.c.b16 %v319, %v318
    %v396 = vpack.c.b16 %v321, %v320
    %v397 = vpack.c.b16 %v323, %v322
    %v398 = vpack.c.b16 %v325, %v324
    %v399 = vpack.c.b16 %v327, %v326
    %v400 = vpack.c.b16 %v329, %v328
    %v401 = vpack.c.b16 %v331, %v330
    %v402 = vpack.c.b16 %v333, %v332
    %v403 = vpack.c.b16 %v335, %v334
    %v404 = vpack.c.b16 %v337, %v336
    %v405 = vpack.c.b16 %v339, %v338
    %v406 = vpack.c.b16 %v341, %v340
    %v407 = vpack.c.b16 %v343, %v342
    %v408 = vpack.c.b16 %v345, %v344
    %v409 = vpack.c.b16 %v347, %v346
    %v410 = vpack.c.b16 %v349, %v348
    %v411 = vpack.c.b16 %v351, %v350
    %v412 = vpack.c.b16 %v353, %v352
    %v413 = vpack.c.b16 %v355, %v354
    %v414 = vpack.c.b16 %v357, %v356
    %v415 = vpack.c.b16 %v359, %v358
    %v416 = vpack.c.b16 %v361, %v360
    %v417 = vpack.c.b16 %v363, %v362
    %v418 = vpack.c.b16 %v365, %v364
    %v419 = vpack.c.b16 %v367, %v366
    %v420 = vpack.c.b16 %v369, %v368
    %v421 = vpack.c.b16 %v371, %v370
    %v422 = vpack.c.b16 %v373, %v372
    %v423 = vpack.c.b16 %v375, %v374
    %472 = vmatpush.bf16.msra.mxu0 %v383
    %473 = vmatpush.bf16.msra.mxu0 %v382
    %474 = vmatpush.bf16.msra.mxu0 %v381
    %475 = vmatpush.bf16.msra.mxu0 %v380
    %476 = vmatpush.bf16.msra.mxu0 %v379
    %477 = vmatpush.bf16.msra.mxu0 %v378
    %478 = vmatpush.bf16.msra.mxu0 %v377
    %479 = vmatpush.bf16.msra.mxu0 %v376
    %480 = vmatmul.bf16.gmra.mxu0 %v82
    %v481 = vpop.f32.mrf.mxu0
    %v482 = vadd.f32 0.0, %v481
    %v483 = vpop.f32.mrf.mxu0
    %484 = vdwg.mxu0
    %485 = vmatpush.bf16.msra.mxu0 %v391
    %486 = vmatpush.bf16.msra.mxu0 %v390
    %487 = vmatpush.bf16.msra.mxu0 %v389
    %488 = vmatpush.bf16.msra.mxu0 %v388
    %489 = vmatpush.bf16.msra.mxu0 %v387
    %490 = vmatpush.bf16.msra.mxu0 %v386
    %491 = vmatpush.bf16.msra.mxu0 %v385
    %492 = vmatpush.bf16.msra.mxu0 %v384
    %493 = vmatmul.bf16.gmra.mxu0 %v83
    %v494 = vpop.f32.mrf.mxu0
    %v495 = vadd.f32 %v482, %v494
    %v496 = vpop.f32.mrf.mxu0
    %497 = vdwg.mxu0
    %498 = vmatpush.bf16.msra.mxu0 %v399
    %499 = vmatpush.bf16.msra.mxu0 %v398
    %500 = vmatpush.bf16.msra.mxu0 %v397
    %501 = vmatpush.bf16.msra.mxu0 %v396
    %502 = vmatpush.bf16.msra.mxu0 %v395
    %503 = vmatpush.bf16.msra.mxu0 %v394
    %504 = vmatpush.bf16.msra.mxu0 %v393
    %505 = vmatpush.bf16.msra.mxu0 %v392
    %506 = vmatmul.bf16.gmra.mxu0 %v84
    %v507 = vpop.f32.mrf.mxu0
    %v508 = vadd.f32 %v495, %v507
    %v509 = vpop.f32.mrf.mxu0
    %510 = vdwg.mxu0
    %511 = vmatpush.bf16.msra.mxu0 %v407
    %512 = vmatpush.bf16.msra.mxu0 %v406
    %513 = vmatpush.bf16.msra.mxu0 %v405
    %514 = vmatpush.bf16.msra.mxu0 %v404
    %515 = vmatpush.bf16.msra.mxu0 %v403
    %516 = vmatpush.bf16.msra.mxu0 %v402
    %517 = vmatpush.bf16.msra.mxu0 %v401
    %518 = vmatpush.bf16.msra.mxu0 %v400
    %519 = vmatmul.bf16.gmra.mxu0 %v85
    %v520 = vpop.f32.mrf.mxu0
    %v521 = vadd.f32 %v508, %v520
    %v522 = vpop.f32.mrf.mxu0
    %523 = vdwg.mxu0
    %524 = vmatpush.bf16.msra.mxu0 %v415
    %525 = vmatpush.bf16.msra.mxu0 %v414
    %526 = vmatpush.bf16.msra.mxu0 %v413
    %527 = vmatpush.bf16.msra.mxu0 %v412
    %528 = vmatpush.bf16.msra.mxu0 %v411
    %529 = vmatpush.bf16.msra.mxu0 %v410
    %530 = vmatpush.bf16.msra.mxu0 %v409
    %531 = vmatpush.bf16.msra.mxu0 %v408
    %532 = vmatmul.bf16.gmra.mxu0 %v86
    %v533 = vpop.f32.mrf.mxu0
    %v534 = vadd.f32 %v521, %v533
    %v535 = vpop.f32.mrf.mxu0
    %536 = vdwg.mxu0
    %537 = vmatpush.bf16.msra.mxu0 %v423
    %538 = vmatpush.bf16.msra.mxu0 %v422
    %539 = vmatpush.bf16.msra.mxu0 %v421
    %540 = vmatpush.bf16.msra.mxu0 %v420
    %541 = vmatpush.bf16.msra.mxu0 %v419
    %542 = vmatpush.bf16.msra.mxu0 %v418
    %543 = vmatpush.bf16.msra.mxu0 %v417
    %544 = vmatpush.bf16.msra.mxu0 %v416
    %545 = vmatmul.bf16.gmra.mxu0 %v87
    %v546 = vpop.f32.mrf.mxu0
    %v547 = vadd.f32 %v534, %v546
    %v548 = vpop.f32.mrf.mxu0
    %549 = vdwg.mxu0
    %550 = vst [vmem:[#allocation8] sm:$0x3] %v547
    %v551 = vmul.f32 %v547, %v547
    %vm552 = vcmask 1041408
    %v553 = vsel %vm552, %v551, 0.0
    %554 = vadd.xlane.f32.xlu0 %v553
    %v555 = vpop.xlane.xlu0 %554
    %v556 = vmax.f32 %v555, 1e-24
    %v557 = vrsqrt.pop %v556
    %v558 = vmul.f32 %v557, %v556
    %v559 = vmul.f32 %v558, %v557
    %v560 = vmul.f32 0.5, %v559
    %v561 = vsub.f32 1.5, %v560
    %v562 = vmul.f32 %v557, %v561
    %vm563 = vweird.f32 %v556
    %vm564 = vweird.f32 %v557
    %vm565 = vmor %vm563, %vm564
    %v566 = vsel %vm565, %v557, %v562
    %v567 = vmul.f32 %v547, %v566
    %v568 = vpack.c.bf16 %v567, %v567
    %v569 = vld [vmem:[#allocation7] sm:$0xf]
    %v570 = vld [vmem:[#allocation7 + $0x4] sm:$0xf]
    %v571 = vld [vmem:[#allocation7 + $0x8] sm:$0xf]
    %v572 = vld [vmem:[#allocation7 + $0xc] sm:$0xf]
    %v573 = vld [vmem:[#allocation7 + $0x10] sm:$0xf]
    %v574 = vld [vmem:[#allocation7 + $0x14] sm:$0xf]
    %v575 = vld [vmem:[#allocation7 + $0x18] sm:$0xf]
    %v576 = vld [vmem:[#allocation7 + $0x1c] sm:$0xf]
    %v577 = vld [vmem:[#allocation7 + $0x20] sm:$0xf]
    %v578 = vld [vmem:[#allocation7 + $0x24] sm:$0xf]
    %v579 = vld [vmem:[#allocation7 + $0x28] sm:$0xf]
    %v580 = vld [vmem:[#allocation7 + $0x2c] sm:$0xf]
    %v581 = vld [vmem:[#allocation7 + $0x30] sm:$0xf]
    %v582 = vld [vmem:[#allocation7 + $0x34] sm:$0xf]
    %v583 = vld [vmem:[#allocation7 + $0x38] sm:$0xf]
    %v584 = vld [vmem:[#allocation7 + $0x3c] sm:$0xf]
    %v601 = vunpack.c.l.b16 %v569
    %v602 = vunpack.c.l.b16 %v570
    %v603 = vunpack.c.l.b16 %v571
    %v604 = vunpack.c.l.b16 %v572
    %v605 = vunpack.c.l.b16 %v573
    %v606 = vunpack.c.l.b16 %v574
    %v607 = vunpack.c.l.b16 %v575
    %v608 = vunpack.c.l.b16 %v576
    %v609 = vunpack.c.l.b16 %v577
    %v610 = vunpack.c.l.b16 %v578
    %v611 = vunpack.c.l.b16 %v579
    %v612 = vunpack.c.l.b16 %v580
    %v613 = vunpack.c.l.b16 %v581
    %v614 = vunpack.c.l.b16 %v582
    %v615 = vunpack.c.l.b16 %v583
    %v616 = vunpack.c.l.b16 %v584
    %v617 = vpack.c.b16 %v602, %v601
    %v618 = vpack.c.b16 %v604, %v603
    %v619 = vpack.c.b16 %v606, %v605
    %v620 = vpack.c.b16 %v608, %v607
    %v621 = vpack.c.b16 %v610, %v609
    %v622 = vpack.c.b16 %v612, %v611
    %v623 = vpack.c.b16 %v614, %v613
    %v624 = vpack.c.b16 %v616, %v615
    %633 = vmatpush.bf16.msra.mxu0 %v624
    %634 = vmatpush.bf16.msra.mxu0 %v623
    %635 = vmatpush.bf16.msra.mxu0 %v622
    %636 = vmatpush.bf16.msra.mxu0 %v621
    %637 = vmatpush.bf16.msra.mxu0 %v620
    %638 = vmatpush.bf16.msra.mxu0 %v619
    %639 = vmatpush.bf16.msra.mxu0 %v618
    %640 = vmatpush.bf16.msra.mxu0 %v617
    %641 = vmatmul.bf16.gmra.mxu0 %v568
    %v642 = vpop.f32.mrf.mxu0
    %v643 = vadd.f32 0.0, %v642
    %v644 = vpop.f32.mrf.mxu0
    %645 = vdwg.mxu0
    %646 = vst [vmem:[#allocation9] sm:$0x3] %v643
    // Predicated region
    $region26: #{tpu_custom_call.1} parent=1 // pred_check
      _
    $region27: #{tpu_custom_call.1} parent=1 // pred_check_branch
      %648 = sbr.rel (0) target = $region29
    $region28: #{tpu_custom_call.1} parent=1 // pred_region
      %650 = vsyncadd [#allocation4], 0
      %s652 = sshll.u32 [#allocation8], 4
      %s653 = int_to_ptr.vmem [resolvable:$true] %s652
      %s654 = sshll.u32 %s3, 4
      %s655 = int_to_ptr.hbm [resolvable:$true] %s654
      %657 = dma.vmem_to_hbm [thread:$0]  %s653, 32, %s655, [#allocation4]
    $region29: #{tpu_custom_call.1} parent=1 // pred_fallthru
      _
    // Predicated region
    $region30: #{tpu_custom_call.1} parent=1 // pred_check
      _
    $region31: #{tpu_custom_call.1} parent=1 // pred_check_branch
      %659 = sbr.rel (0) target = $region33
    $region32: #{tpu_custom_call.1} parent=1 // pred_region
      %661 = vsyncadd [#allocation10], 0
      %s663 = sshll.u32 [#allocation9], 4
      %s664 = int_to_ptr.vmem [resolvable:$true] %s663
      %s665 = sshll.u32 %s4, 4
      %s666 = int_to_ptr.hbm [resolvable:$true] %s665
      %668 = dma.vmem_to_hbm [thread:$0]  %s664, 32, %s666, [#allocation10]
    $region33: #{tpu_custom_call.1} parent=1 // pred_fallthru
      _
    // Predicated region
    $region34: #{tpu_custom_call.1} parent=1 // pred_check
      _
    $region35: #{tpu_custom_call.1} parent=1 // pred_check_branch
      %670 = sbr.rel (0) target = $region37
    $region36: #{tpu_custom_call.1} parent=1 // pred_region
      %672 = dma.done [#allocation4], 32
    $region37: #{tpu_custom_call.1} parent=1 // pred_fallthru
      _
    // Predicated region
    $region38: #{tpu_custom_call.1} parent=1 // pred_check
      _
    $region39: #{tpu_custom_call.1} parent=1 // pred_check_branch
      %674 = sbr.rel (0) target = $region41
    $region40: #{tpu_custom_call.1} parent=1 // pred_region
      %676 = dma.done [#allocation10], 32
    $region41: #{tpu_custom_call.1} parent=1 // pred_fallthru
      _
    %677 = vsyncpa [#allocation3], 1
    %678 = vsyncpa [#allocation6], 1
    %679 = vsyncpa [#allocation4], 1
    %680 = vsyncpa [#allocation10], 1

</llo_original>
